<compile_context>
chip_gen: v5e
topology: v5e:2x2
jax: 0.10.0
libtpu: 0.0.40
codegen_flags: <defaults>
</compile_context>

<pallas_src>
import functools

import jax
import jax.numpy as jnp
from jax.experimental import pallas as pl
from jax.experimental.pallas import tpu as pltpu


def _round_up(x, m):
    return (x + m - 1) // m * m


def _tpu_tuning():
    """(row-tile M cap, vmem_limit_bytes) per TPU generation."""
    try:
        kind = jax.devices()[0].device_kind.lower()
    except Exception:
        kind = ""
    if "v5" in kind or "v6" in kind:
        # 128 MiB VMEM: large tiles amortize the ~0.35us/step pipeline cost.
        return 1024, 96 * 1024 * 1024
    # v7x (64 MiB per TensorCore) or unknown chip: tighter budget.
    return 512, 44 * 1024 * 1024


def _pick_row_tile(Ho, Wo, m_cap):
    """Output-row tile height Ht.

    Single tile whenever Ho*Wo fits the M cap; otherwise the largest divisor
    of Ho with Ht*Wo <= m_cap and Ht*Wo a multiple of 8 (so the flattened
    output block stays sublane-legal).  Falls back to one big tile.
    """
    if Ho * Wo <= m_cap:
        return Ho
    for t in range(Ho - 1, 0, -1):
        if Ho % t == 0 and t * Wo <= m_cap and (t * Wo) % 8 == 0:
            return t
    return Ho  # correctness fallback (not reached for GoogLeNet shapes)


def _conv_relu_kernel(x_ref, w_ref, b_ref, o_ref, *, Ht, Wo, KH, KW,
                      Cin_p, Cout_p):
    """One (batch n, output-row-tile r) grid step.

    x_ref: (1, Hp, Wp, Cin_p)      padded NHWC slab for batch element n (bf16)
    w_ref: (KH*KW*Cin_p, Cout_p)   im2col weights, rows ordered (kh, kw, cin) (bf16)
    b_ref: (1, Cout_p)             zero-padded bias (f32)
    o_ref: (1, Ht*Wo, Cout_out)    flattened lane-major output row tile (f32)
    """
    r = pl.program_id(1)
    Hpt = Ht + KH - 1                                    # rows needed (halo)
    row0 = pl.multiple_of(r * Ht, Ht)
    x = x_ref[0, pl.ds(row0, Hpt), :, :]                 # (Hpt, Wp, Cin_p), one load
    M = Ht * Wo

    if Cin_p < 128:
        # Stem-like layers: im2col once, single MXU matmul, K = KH*KW*Cin_p.
        cols = []
        for kh in range(KH):                             # small static unroll
            for kw in range(KW):
                cols.append(x[kh:kh + Ht, kw:kw + Wo, :])  # (Ht, Wo, Cin_p)
        lhs = jnp.concatenate(cols, axis=-1).reshape(M, KH * KW * Cin_p)
        acc = jnp.dot(lhs, w_ref[...], preferred_element_type=jnp.float32)
    else:
        # Channel-rich layers: K = Cin_p is already MXU-efficient, so skip the
        # materialized im2col and accumulate KH*KW matmuls into one f32 acc.
        acc = jnp.zeros((M, Cout_p), jnp.float32)
        for kh in range(KH):
            for kw in range(KW):
                tap = kh * KW + kw
                lhs = x[kh:kh + Ht, kw:kw + Wo, :].reshape(M, Cin_p)
                w_tap = w_ref[tap * Cin_p:(tap + 1) * Cin_p, :]
                acc = acc + jnp.dot(lhs, w_tap,
                                    preferred_element_type=jnp.float32)

    acc = acc + b_ref[...]                               # (1, Cout_p) broadcast
    out = jnp.maximum(acc, 0.0)                          # fused ReLU
    # Store only the channels the output buffer actually keeps (padded or not).
    o_ref[0] = out[:, :o_ref.shape[-1]].astype(o_ref.dtype)


def basic_conv2d(x_nchw, weight_oihw, bias, *, stride=1, padding=0):
    """Equivalent of BasicConv2d.forward: relu(conv2d(x)), NCHW in/out.

    x_nchw:      (N, Cin, H, W)      float32
    weight_oihw: (Cout, Cin, KH, KW) float32
    bias:        (Cout,)             float32
    returns:     (N, Cout, Ho, Wo)   float32
    """
    # TODO(synk): only stride=1 is implemented in the Pallas path (GoogLeNet's
    # stride-2 stem layers would need a strided im2col / output subsampling).
    assert stride == 1, "stride != 1 not implemented"
    N, Cin, H, W = x_nchw.shape
    Cout, Cin_w, KH, KW = weight_oihw.shape
    assert Cin == Cin_w
    Ho = H + 2 * padding - KH + 1
    Wo = W + 2 * padding - KW + 1

    Cin_p = _round_up(Cin, 8)        # sublane-friendly contraction chunk
    Cout_p = _round_up(Cout, 128)    # lane-dense matmul N dim
    # Small-Cout branches: skip the padded-channel HBM writeback entirely.
    Cout_out = Cout if Cout_p >= 2 * Cout else Cout_p

    m_cap, vmem_limit = _tpu_tuning()

    # Layout glue in plain JAX: NCHW -> NHWC (bf16), spatial + channel pad.
    # TODO(synk): in a full NHWC network these transposes disappear entirely.
    x = jnp.transpose(x_nchw, (0, 2, 3, 1)).astype(jnp.bfloat16)
    x = jnp.pad(x, ((0, 0), (padding, padding), (padding, padding),
                    (0, Cin_p - Cin)))
    Hp, Wp = x.shape[1], x.shape[2]

    # OIHW -> HWIO (bf16), pad, flatten to im2col contraction layout (kh,kw,cin).
    w = jnp.transpose(weight_oihw, (2, 3, 1, 0)).astype(jnp.bfloat16)
    w = jnp.pad(w, ((0, 0), (0, 0), (0, Cin_p - Cin), (0, Cout_p - Cout)))
    w = w.reshape(KH * KW * Cin_p, Cout_p)

    b = jnp.pad(bias.astype(jnp.float32), (0, Cout_p - Cout)).reshape(1, Cout_p)

    Ht = _pick_row_tile(Ho, Wo, m_cap)
    n_row_tiles = Ho // Ht

    kernel = functools.partial(_conv_relu_kernel, Ht=Ht, Wo=Wo, KH=KH, KW=KW,
                               Cin_p=Cin_p, Cout_p=Cout_p)

    out_flat = pl.pallas_call(
        kernel,
        out_shape=jax.ShapeDtypeStruct((N, Ho * Wo, Cout_out), jnp.float32),
        grid_spec=pltpu.PrefetchScalarGridSpec(
            num_scalar_prefetch=0,
            grid=(N, n_row_tiles),
            in_specs=[
                # Whole padded slab per batch element; block index is invariant
                # along r so it is not re-DMA'd across row tiles.
                pl.BlockSpec((1, Hp, Wp, Cin_p), lambda n, r: (n, 0, 0, 0)),
                # Weights / bias are grid-invariant (fetched once).
                pl.BlockSpec((KH * KW * Cin_p, Cout_p), lambda n, r: (0, 0)),
                pl.BlockSpec((1, Cout_p), lambda n, r: (0, 0)),
            ],
            out_specs=pl.BlockSpec((1, Ht * Wo, Cout_out),
                                   lambda n, r: (n, r, 0)),
        ),
        compiler_params=pltpu.CompilerParams(
            dimension_semantics=("parallel", "parallel"),
            vmem_limit_bytes=vmem_limit,
        ),
    )(x, w, b)

    # Free metadata reshape + channel strip + NCHW transpose in the wrapper.
    out_nhwc = out_flat.reshape(N, Ho, Wo, Cout_out)[..., :Cout]
    return jnp.transpose(out_nhwc, (0, 3, 1, 2))


def _reference(x_nchw, weight_oihw, bias, padding=0):
    out = jax.lax.conv_general_dilated(
        x_nchw, weight_oihw,
        window_strides=(1, 1),
        padding=[(padding, padding), (padding, padding)],
        dimension_numbers=("NCHW", "OIHW", "NCHW"),
    )
    out = out + bias[None, :, None, None]
    return jnp.maximum(out, 0.0)


if __name__ == "__main__":
    # BasicConv2d(in_channels=4, out_channels=8, kernel_size=3, padding=1)
    N, Cin, H, W = 2, 4, 16, 16
    Cout, KH, KW = 8, 3, 3

    key = jax.random.PRNGKey(0)
    k_x, k_w, k_b = jax.random.split(key, 3)
    x = jax.random.normal(k_x, (N, Cin, H, W), dtype=jnp.float32)
    weight = jax.random.normal(k_w, (Cout, Cin, KH, KW), dtype=jnp.float32) * 0.1
    bias = jax.random.normal(k_b, (Cout,), dtype=jnp.float32) * 0.1

    out = jax.block_until_ready(basic_conv2d(x, weight, bias, stride=1, padding=1))
    ref = jax.block_until_ready(_reference(x, weight, bias, padding=1))

    assert out.shape == (N, Cout, H, W), out.shape
    # bf16 MXU operands (f32 accumulation) -> slightly looser tolerance vs the
    # full-f32 lax.conv reference.
    assert jnp.allclose(out, ref, atol=2e-2, rtol=2e-2), "mismatch vs reference"

    print("KERNEL_OK")
</pallas_src>

<mosaic_0001>
module attributes {stable_mosaic.version = 11 : i64} {
  func.func @_conv_relu_kernel(%arg0: i32, %arg1: i32, %arg2: memref<1x18x18x8xbf16, #tpu.memory_space<vmem>>, %arg3: memref<72x128xbf16, #tpu.memory_space<vmem>>, %arg4: memref<1x128xf32, #tpu.memory_space<vmem>>, %arg5: memref<1x256x8xf32, #tpu.memory_space<vmem>>) attributes {dimension_semantics = [#tpu.dimension_semantics<parallel>, #tpu.dimension_semantics<parallel>], iteration_bounds = array<i64: 2, 1>, scalar_prefetch = 0 : i64, scratch_operands = 0 : i64, tpu.core_type = #tpu.core_type<tc>, window_params = [{transform_indices = @transform_0, window_bounds = array<i64: 1, 18, 18, 8>}, {pipeline_mode = #tpu.pipeline_mode<synchronous>, transform_indices = @transform_1, window_bounds = array<i64: 72, 128>}, {pipeline_mode = #tpu.pipeline_mode<synchronous>, transform_indices = @transform_2, window_bounds = array<i64: 1, 128>}, {transform_indices = @transform_3, window_bounds = array<i64: 1, 256, 8>}]} {
    %c16_i32 = arith.constant 16 : i32
    %0 = arith.muli %arg1, %c16_i32 : i32
    %1 = tpu.assume_multiple %0, 16 : i32
    %c0 = arith.constant 0 : index
    %2 = arith.index_cast %1 : i32 to index
    %c0_0 = arith.constant 0 : index
    %c0_1 = arith.constant 0 : index
    %3 = vector.load %arg2[%c0, %2, %c0_0, %c0_1] : memref<1x18x18x8xbf16, #tpu.memory_space<vmem>>, vector<1x18x18x8xbf16>
    %4 = vector.shape_cast %3 : vector<1x18x18x8xbf16> to vector<18x18x8xbf16>
    %5 = vector.extract_strided_slice %4 {offsets = [0, 0, 0], sizes = [16, 16, 8], strides = [1, 1, 1]} : vector<18x18x8xbf16> to vector<16x16x8xbf16>
    %6 = vector.extract_strided_slice %4 {offsets = [0, 1, 0], sizes = [16, 16, 8], strides = [1, 1, 1]} : vector<18x18x8xbf16> to vector<16x16x8xbf16>
    %7 = vector.extract_strided_slice %4 {offsets = [0, 2, 0], sizes = [16, 16, 8], strides = [1, 1, 1]} : vector<18x18x8xbf16> to vector<16x16x8xbf16>
    %8 = vector.extract_strided_slice %4 {offsets = [1, 0, 0], sizes = [16, 16, 8], strides = [1, 1, 1]} : vector<18x18x8xbf16> to vector<16x16x8xbf16>
    %9 = vector.extract_strided_slice %4 {offsets = [1, 1, 0], sizes = [16, 16, 8], strides = [1, 1, 1]} : vector<18x18x8xbf16> to vector<16x16x8xbf16>
    %10 = vector.extract_strided_slice %4 {offsets = [1, 2, 0], sizes = [16, 16, 8], strides = [1, 1, 1]} : vector<18x18x8xbf16> to vector<16x16x8xbf16>
    %11 = vector.extract_strided_slice %4 {offsets = [2, 0, 0], sizes = [16, 16, 8], strides = [1, 1, 1]} : vector<18x18x8xbf16> to vector<16x16x8xbf16>
    %12 = vector.extract_strided_slice %4 {offsets = [2, 1, 0], sizes = [16, 16, 8], strides = [1, 1, 1]} : vector<18x18x8xbf16> to vector<16x16x8xbf16>
    %13 = vector.extract_strided_slice %4 {offsets = [2, 2, 0], sizes = [16, 16, 8], strides = [1, 1, 1]} : vector<18x18x8xbf16> to vector<16x16x8xbf16>
    %14 = tpu.concatenate %5, %6, %7, %8, %9, %10, %11, %12, %13 in 2 : vector<16x16x8xbf16>, vector<16x16x8xbf16>, vector<16x16x8xbf16>, vector<16x16x8xbf16>, vector<16x16x8xbf16>, vector<16x16x8xbf16>, vector<16x16x8xbf16>, vector<16x16x8xbf16>, vector<16x16x8xbf16> -> vector<16x16x72xbf16>
    %15 = vector.shape_cast %14 : vector<16x16x72xbf16> to vector<256x72xbf16>
    %c0_2 = arith.constant 0 : index
    %c0_3 = arith.constant 0 : index
    %16 = vector.load %arg3[%c0_2, %c0_3] : memref<72x128xbf16, #tpu.memory_space<vmem>>, vector<72x128xbf16>
    %cst = arith.constant dense<0.000000e+00> : vector<256x128xf32>
    %17 = tpu.matmul %15, %16, %cst {dimension_numbers = #tpu.dot_dimension_numbers<[1], [0], [0], [1], [0, 0, 1, 1], [], []>} : vector<256x72xbf16>, vector<72x128xbf16>, vector<256x128xf32> -> vector<256x128xf32>
    %c0_4 = arith.constant 0 : index
    %c0_5 = arith.constant 0 : index
    %18 = vector.load %arg4[%c0_4, %c0_5] : memref<1x128xf32, #tpu.memory_space<vmem>>, vector<1x128xf32>
    %19 = vector.broadcast %18 : vector<1x128xf32> to vector<256x128xf32>
    %20 = arith.addf %17, %19 : vector<256x128xf32>
    %cst_6 = arith.constant 0.000000e+00 : f32
    %21 = vector.broadcast %cst_6 : f32 to vector<256x128xf32>
    %22 = arith.maximumf %20, %21 : vector<256x128xf32>
    %23 = vector.extract_strided_slice %22 {offsets = [0, 0], sizes = [256, 8], strides = [1, 1]} : vector<256x128xf32> to vector<256x8xf32>
    %c0_7 = arith.constant 0 : index
    %c0_8 = arith.constant 0 : index
    %c0_9 = arith.constant 0 : index
    %24 = vector.load %arg5[%c0_7, %c0_8, %c0_9] : memref<1x256x8xf32, #tpu.memory_space<vmem>>, vector<1x256x8xf32>
    %25 = vector.shape_cast %24 : vector<1x256x8xf32> to vector<256x8xf32>
    %26 = vector.shape_cast %23 : vector<256x8xf32> to vector<1x256x8xf32>
    tpu.vector_store %arg5[%c0_7, %c0_8, %c0_9], %26 {strides = array<i32>} : memref<1x256x8xf32, #tpu.memory_space<vmem>>, vector<1x256x8xf32>,
    return
  }
  func.func @transform_0(%arg0: i32, %arg1: i32) -> (i32, i32, i32, i32) {
    %c0_i32 = arith.constant 0 : i32
    %c0_i32_0 = arith.constant 0 : i32
    %c0_i32_1 = arith.constant 0 : i32
    %c0_i32_2 = arith.constant 0 : i32
    return %arg0, %c0_i32, %c0_i32_0, %c0_i32_1 : i32, i32, i32, i32
  }
  func.func @transform_1(%arg0: i32, %arg1: i32) -> (i32, i32) {
    %c0_i32 = arith.constant 0 : i32
    %c0_i32_0 = arith.constant 0 : i32
    %c0_i32_1 = arith.constant 0 : i32
    return %c0_i32, %c0_i32_0 : i32, i32
  }
  func.func @transform_2(%arg0: i32, %arg1: i32) -> (i32, i32) {
    %c0_i32 = arith.constant 0 : i32
    %c0_i32_0 = arith.constant 0 : i32
    %c0_i32_1 = arith.constant 0 : i32
    return %c0_i32, %c0_i32_0 : i32, i32
  }
  func.func @transform_3(%arg0: i32, %arg1: i32) -> (i32, i32, i32) {
    %c0_i32 = arith.constant 0 : i32
    %c0_i32_0 = arith.constant 0 : i32
    return %arg0, %arg1, %c0_i32 : i32, i32, i32
  }
}

</mosaic_0001>

<llo_original>
// kernel: tpu_custom_call.1
$region0: #{tpu_custom_call.1}
  #allocation0 [shape = 'u32[]', space=smem, size = 0x4, offset = 0x4, fixed_abs, tag = 'smem constant byte address 0x4 - core index']
  #allocation1 [shape = 'u32[72,128]{1,0:T(1,128)}', space=vmem, size = 0x9000, scoped, tag = 'internal scratch']
  %s0 = inlined_call_operand.vmem [shape: bf16[2,18,18,8], index: 0, kind: input, shape index: {}]
  %s1 = inlined_call_operand.vmem [shape: bf16[72,128], index: 1, kind: input, shape index: {}]
  %s2 = inlined_call_operand.vmem [shape: f32[1,128], index: 2, kind: input, shape index: {}]
  %s3 = inlined_call_operand.vmem [shape: f32[2,256,8], index: 3, kind: output, shape index: {}]
  %s4 = sld [smem:[#allocation0]]
  $region45: #{tpu_custom_call.1} parent=0
    _
  %s6 = ssub.s32 1, %s4
  %s7 = scalar_select 0, %s6, %s4
  loop: start=0, step=1, limit=4
  $region2: #{tpu_custom_call.1} parent=0 // loop_pre_header
    _
  $region3: #{tpu_custom_call.1} parent=0 // loop_header
    %s9 = sphi 0, %s13
    %p10 = scmp.ge.s32.totalorder %s9, 4
    %s16 = sphi 0, %s28
    %s17 = sphi 0, %s24
    %s18 = sphi 0, %s16
    %s19 = sphi 0, %s17
    %s20 = sphi 0, %s18
    %s21 = sphi 0, %s19
    %s31 = sphi 0, %s33
    %s34 = sphi 0, %s31
    %s35 = sphi 0, %s34
    %s51 = sphi 0, %s35
    %s55 = sphi 0, %s55
    %s57 = sphi 0, %s55
    %s58 = sphi 0, %s57
    %s72 = sphi 0, %s58
    %s76 = sphi 0, %s76
    %s78 = sphi 0, %s76
    %s79 = sphi 0, %s78
    %s93 = sphi 0, %s79
    %s101 = sphi 0, %s103
    %s104 = sphi 0, %s101
    %s105 = sphi 0, %s104
    %s121 = sphi 0, %s105
  $region4: #{tpu_custom_call.1} parent=0 // loop_header_branch
    %12 = sbr.rel (%p10) target = $region8
  $region5: #{tpu_custom_call.1} parent=0 // loop_body
    %s14 = ssub.s32 %s9, 1
    %s15 = ssub.s32 %s9, 2
    %s22 = sadd.s32 1, %s17
    %p23 = scmp.ge.s32.totalorder %s22, 1
    %s24 = scalar_select %p23, 0, %s22
    %s25 = sadd.s32 1, %s16
    %s26 = scalar_select %p23, %s25, %s16
    %p27 = scmp.ge.s32.totalorder %s26, 2
    %s28 = scalar_select %p27, 0, %s26
    %s29 = ssub.s32 %s16, %s28
    %p30 = scmp.eq.s32.totalorder %s29, 0
    %s32 = sadd.s32 %s31, 1
    %s33 = scalar_select %p30, %s31, %s32
    %p36 = pneg %p30
    %p37 = scmp.eq.s32.totalorder %s9, 1
    %p38 = por %p36, %p37
    %p39 = scmp.ne.s32.totalorder %s31, %s34
    %p40 = scmp.eq.s32.totalorder %s9, 0
    %p41 = por %p39, %p40
    %p42 = scmp.ne.s32.totalorder %s31, %s34
    %p43 = scmp.eq.s32.totalorder %s14, 1
    %p44 = por %p42, %p43
    %p45 = scmp.ne.s32.totalorder %s34, %s35
    %p46 = scmp.eq.s32.totalorder %s14, 0
    %p47 = por %p45, %p46
    %p48 = scmp.ne.s32.totalorder %s34, %s35
    %p49 = scmp.eq.s32.totalorder %s15, 1
    %p50 = por %p48, %p49
    %p52 = scmp.ne.s32.totalorder %s35, %s51
    %p53 = scmp.eq.s32.totalorder %s15, 0
    %p54 = por %p52, %p53
    %s56 = sadd.s32 %s55, 1
    %p59 = scmp.eq.s32.totalorder %s9, 1
    %p60 = scmp.ne.s32.totalorder %s55, %s57
    %p61 = scmp.eq.s32.totalorder %s9, 0
    %p62 = por %p60, %p61
    %p63 = scmp.ne.s32.totalorder %s55, %s57
    %p64 = scmp.eq.s32.totalorder %s14, 1
    %p65 = por %p63, %p64
    %p66 = scmp.ne.s32.totalorder %s57, %s58
    %p67 = scmp.eq.s32.totalorder %s14, 0
    %p68 = por %p66, %p67
    %p69 = scmp.ne.s32.totalorder %s57, %s58
    %p70 = scmp.eq.s32.totalorder %s15, 1
    %p71 = por %p69, %p70
    %p73 = scmp.ne.s32.totalorder %s58, %s72
    %p74 = scmp.eq.s32.totalorder %s15, 0
    %p75 = por %p73, %p74
    %s77 = sadd.s32 %s76, 1
    %p80 = scmp.eq.s32.totalorder %s9, 1
    %p81 = scmp.ne.s32.totalorder %s76, %s78
    %p82 = scmp.eq.s32.totalorder %s9, 0
    %p83 = por %p81, %p82
    %p84 = scmp.ne.s32.totalorder %s76, %s78
    %p85 = scmp.eq.s32.totalorder %s14, 1
    %p86 = por %p84, %p85
    %p87 = scmp.ne.s32.totalorder %s78, %s79
    %p88 = scmp.eq.s32.totalorder %s14, 0
    %p89 = por %p87, %p88
    %p90 = scmp.ne.s32.totalorder %s78, %s79
    %p91 = scmp.eq.s32.totalorder %s15, 1
    %p92 = por %p90, %p91
    %p94 = scmp.ne.s32.totalorder %s79, %s93
    %p95 = scmp.eq.s32.totalorder %s15, 0
    %p96 = por %p94, %p95
    %s97 = ssub.s32 %s16, %s28
    %s98 = ssub.s32 %s17, %s24
    %s99 = sor.u32 %s97, %s98
    %p100 = scmp.eq.s32.totalorder %s99, 0
    %s102 = sadd.s32 %s101, 1
    %s103 = scalar_select %p100, %s101, %s102
    %p106 = pneg %p100
    %p107 = scmp.eq.s32.totalorder %s9, 1
    %p108 = por %p106, %p107
    %p109 = scmp.ne.s32.totalorder %s101, %s104
    %p110 = scmp.eq.s32.totalorder %s9, 0
    %p111 = por %p109, %p110
    %p112 = scmp.ne.s32.totalorder %s101, %s104
    %p113 = scmp.eq.s32.totalorder %s14, 1
    %p114 = por %p112, %p113
    %p115 = scmp.ne.s32.totalorder %s104, %s105
    %p116 = scmp.eq.s32.totalorder %s14, 0
    %p117 = por %p115, %p116
    %p118 = scmp.ne.s32.totalorder %s104, %s105
    %p119 = scmp.eq.s32.totalorder %s15, 1
    %p120 = por %p118, %p119
    %p122 = scmp.ne.s32.totalorder %s105, %s121
    %p123 = scmp.eq.s32.totalorder %s15, 0
    %p124 = por %p122, %p123
    %p125 = scmp.le.s32.totalorder 1, %s9
    %p126 = scmp.lt.s32.totalorder %s9, 3
    %p127 = pnand %p125, %p126
    %p128 = pneg %p127
    // Predicated region
    $region9: #{tpu_custom_call.1} parent=5 // pred_check
      _
    $region10: #{tpu_custom_call.1} parent=5 // pred_check_branch
      %130 = sbr.rel (%p127) target = $region12
    $region11: #{tpu_custom_call.1} parent=5 // pred_region
      %s131 = ssub.s32 %s9, 1
      // Predicated region
      $region13: #{tpu_custom_call.1} parent=11 // pred_check
        %p132 = pneg %p68
      $region14: #{tpu_custom_call.1} parent=11 // pred_check_branch
        %134 = sbr.rel (%p132) target = $region16
      $region15: #{tpu_custom_call.1} parent=11 // pred_region
        _
      $region16: #{tpu_custom_call.1} parent=11 // pred_fallthru
        _
      // Predicated region
      $region17: #{tpu_custom_call.1} parent=11 // pred_check
        %p135 = pneg %p89
      $region18: #{tpu_custom_call.1} parent=11 // pred_check_branch
        %137 = sbr.rel (%p135) target = $region20
      $region19: #{tpu_custom_call.1} parent=11 // pred_region
        _
      $region20: #{tpu_custom_call.1} parent=11 // pred_fallthru
        _
    $region12: #{tpu_custom_call.1} parent=5 // pred_fallthru
      _
    %p138 = scmp.lt.s32.totalorder %s9, 2
    // Predicated region
    $region21: #{tpu_custom_call.1} parent=5 // pred_check
      %p139 = pneg %p138
    $region22: #{tpu_custom_call.1} parent=5 // pred_check_branch
      %141 = sbr.rel (%p139) target = $region24
    $region23: #{tpu_custom_call.1} parent=5 // pred_region
      // Predicated region
      $region25: #{tpu_custom_call.1} parent=23 // pred_check
        %p142 = pneg %p41
      $region26: #{tpu_custom_call.1} parent=23 // pred_check_branch
        %144 = sbr.rel (%p142) target = $region28
      $region27: #{tpu_custom_call.1} parent=23 // pred_region
        %p145 = scmp.lt.s32.totalorder %s16, 1
        %s146 = scalar_select %p145, %s16, 1
        %s147 = smul.addr %s146, 54
        %s148 = smul.addr %s147, 4
        %s149 = scalar_lea.vmem %s0, %s148
      $region28: #{tpu_custom_call.1} parent=23 // pred_fallthru
        _
    $region24: #{tpu_custom_call.1} parent=5 // pred_fallthru
      _
    %p150 = scmp.le.s32.totalorder 1, %s9
    %p151 = scmp.lt.s32.totalorder %s9, 3
    %p152 = pnand %p150, %p151
    %p153 = pneg %p152
    // Predicated region
    $region29: #{tpu_custom_call.1} parent=5 // pred_check
      _
    $region30: #{tpu_custom_call.1} parent=5 // pred_check_branch
      %155 = sbr.rel (%p152) target = $region32
    $region31: #{tpu_custom_call.1} parent=5 // pred_region
      %s156 = ssub.s32 %s9, 1
      %p157 = scmp.lt.s32.totalorder %s18, 1
      %s158 = scalar_select %p157, %s18, 1
      %s159 = smul.addr %s158, 54
      %s160 = smul.addr %s159, 4
      %s161 = scalar_lea.vmem %s0, %s160
      %p162 = pneg %p47
      %p163 = pneg %p44
      %p164 = pneg %p68
      %p165 = pneg %p65
      %p166 = pneg %p89
      %p167 = pneg %p86
      %p168 = pneg %p117
      %p169 = pneg %p114
      %s170 = smul.u32 32, %s19
      %p171 = scmp.lt.s32.totalorder %s18, 1
      %s172 = scalar_select %p171, %s18, 1
      %p173 = scmp.lt.s32.totalorder %s170, 31
      %s174 = scalar_select %p173, %s170, 31
      %s175 = smul.addr %s172, 32
      %s176 = sadd.s32 %s174, %s175
      %s177 = smul.addr %s176, 8
      %s178 = scalar_lea.vmem %s3, %s177
      %p179 = scmp.lt.s32.totalorder %s18, 1
      %s180 = scalar_select %p179, %s18, 1
      %s181 = smul.addr %s180, 54
      %s182 = smul.addr %s181, 4
      %s183 = scalar_lea.vmem %s0, %s182
      %s184 = smul.u32 32, %s19
      %p185 = scmp.lt.s32.totalorder %s18, 1
      %s186 = scalar_select %p185, %s18, 1
      %p187 = scmp.lt.s32.totalorder %s184, 31
      %s188 = scalar_select %p187, %s184, 31
      %s189 = smul.addr %s186, 32
      %s190 = sadd.s32 %s188, %s189
      %s191 = smul.addr %s190, 8
      %s192 = scalar_lea.vmem %s3, %s191
      %s193 = smul.u32 32, %s19
      %s195 = smul.u32 %s19, 16
      %s196 = smul.u32 %s195, 3
      %s197 = smul.addr %s196, 4
      %s198 = scalar_lea.vmem %s183, %s197
      %v199 = vld [vmem:[%s198] sm:$0xf]
      %v200 = vld [vmem:[%s198 + $0x4] sm:$0xf]
      %v201 = vld [vmem:[%s198 + $0x8] sm:$0x1]
      %v202 = vld [vmem:[%s198 + $0xc] sm:$0xf]
      %v203 = vld [vmem:[%s198 + $0x10] sm:$0xf]
      %v204 = vld [vmem:[%s198 + $0x14] sm:$0x1]
      %v205 = vld [vmem:[%s198 + $0x18] sm:$0xf]
      %v206 = vld [vmem:[%s198 + $0x1c] sm:$0xf]
      %v207 = vld [vmem:[%s198 + $0x20] sm:$0x1]
      %v208 = vld [vmem:[%s198 + $0x24] sm:$0xf]
      %v209 = vld [vmem:[%s198 + $0x28] sm:$0xf]
      %v210 = vld [vmem:[%s198 + $0x2c] sm:$0x1]
      %v211 = vld [vmem:[%s198 + $0x30] sm:$0xf]
      %v212 = vld [vmem:[%s198 + $0x34] sm:$0xf]
      %v213 = vld [vmem:[%s198 + $0x38] sm:$0x1]
      %v214 = vld [vmem:[%s198 + $0x3c] sm:$0xf]
      %v215 = vld [vmem:[%s198 + $0x40] sm:$0xf]
      %v216 = vld [vmem:[%s198 + $0x44] sm:$0x1]
      %v217 = vld [vmem:[%s198 + $0x48] sm:$0xf]
      %v218 = vld [vmem:[%s198 + $0x4c] sm:$0xf]
      %v219 = vld [vmem:[%s198 + $0x50] sm:$0x1]
      %v220 = vld [vmem:[%s198 + $0x54] sm:$0xf]
      %v221 = vld [vmem:[%s198 + $0x58] sm:$0xf]
      %v222 = vld [vmem:[%s198 + $0x5c] sm:$0x1]
      %v223 = vld [vmem:[%s198 + $0x60] sm:$0xf]
      %v224 = vld [vmem:[%s198 + $0x64] sm:$0xf]
      %v225 = vld [vmem:[%s198 + $0x68] sm:$0x1]
      %v226 = vld [vmem:[%s198 + $0x6c] sm:$0xf]
      %v227 = vld [vmem:[%s198 + $0x70] sm:$0xf]
      %v228 = vld [vmem:[%s198 + $0x74] sm:$0x1]
      %v229 = vld [vmem:[%s198 + $0x78] sm:$0xf]
      %v230 = vld [vmem:[%s198 + $0x7c] sm:$0xf]
      %v231 = vld [vmem:[%s198 + $0x80] sm:$0x1]
      %v232 = vld [vmem:[%s198 + $0x84] sm:$0xf]
      %v233 = vld [vmem:[%s198 + $0x88] sm:$0xf]
      %v234 = vld [vmem:[%s198 + $0x8c] sm:$0x1]
      %v235 = vld [vmem:[%s198 + $0x90] sm:$0xf]
      %v236 = vld [vmem:[%s198 + $0x94] sm:$0xf]
      %v237 = vld [vmem:[%s198 + $0x98] sm:$0x1]
      %v238 = vld [vmem:[%s198 + $0x9c] sm:$0xf]
      %v239 = vld [vmem:[%s198 + $0xa0] sm:$0xf]
      %v240 = vld [vmem:[%s198 + $0xa4] sm:$0x1]
      %v241 = vld [vmem:[%s198 + $0xa8] sm:$0xf]
      %v242 = vld [vmem:[%s198 + $0xac] sm:$0xf]
      %v243 = vld [vmem:[%s198 + $0xb0] sm:$0x1]
      %v244 = vld [vmem:[%s198 + $0xb4] sm:$0xf]
      %v245 = vld [vmem:[%s198 + $0xb8] sm:$0xf]
      %v246 = vld [vmem:[%s198 + $0xbc] sm:$0x1]
      %v247 = vld [vmem:[%s198 + $0xc0] sm:$0xf]
      %v248 = vld [vmem:[%s198 + $0xc4] sm:$0xf]
      %v249 = vld [vmem:[%s198 + $0xc8] sm:$0x1]
      %v250 = vld [vmem:[%s198 + $0xcc] sm:$0xf]
      %v251 = vld [vmem:[%s198 + $0xd0] sm:$0xf]
      %v252 = vld [vmem:[%s198 + $0xd4] sm:$0x1]
      %v285 = vunpack.c.l.b16 %v199
      %v286 = vunpack.c.l.b16 %v200
      %v287 = vunpack.c.l.b16 %v202
      %v288 = vunpack.c.l.b16 %v203
      %v289 = vunpack.c.l.b16 %v205
      %v290 = vunpack.c.l.b16 %v206
      %v291 = vunpack.c.l.b16 %v208
      %v292 = vunpack.c.l.b16 %v209
      %v293 = vunpack.c.l.b16 %v211
      %v294 = vunpack.c.l.b16 %v212
      %v295 = vunpack.c.l.b16 %v214
      %v296 = vunpack.c.l.b16 %v215
      %v297 = vunpack.c.l.b16 %v217
      %v298 = vunpack.c.l.b16 %v218
      %v299 = vunpack.c.l.b16 %v220
      %v300 = vunpack.c.l.b16 %v221
      %v301 = vunpack.c.l.b16 %v223
      %v302 = vunpack.c.l.b16 %v224
      %v303 = vunpack.c.l.b16 %v226
      %v304 = vunpack.c.l.b16 %v227
      %v305 = vunpack.c.l.b16 %v229
      %v306 = vunpack.c.l.b16 %v230
      %v307 = vunpack.c.l.b16 %v232
      %v308 = vunpack.c.l.b16 %v233
      %v309 = vunpack.c.l.b16 %v235
      %v310 = vunpack.c.l.b16 %v236
      %v311 = vunpack.c.l.b16 %v238
      %v312 = vunpack.c.l.b16 %v239
      %v313 = vunpack.c.l.b16 %v241
      %v314 = vunpack.c.l.b16 %v242
      %v315 = vunpack.c.l.b16 %v244
      %v316 = vunpack.c.l.b16 %v245
      %v317 = vpack.c.b16 %v286, %v285
      %v318 = vpack.c.b16 %v288, %v287
      %v319 = vpack.c.b16 %v290, %v289
      %v320 = vpack.c.b16 %v292, %v291
      %v321 = vpack.c.b16 %v294, %v293
      %v322 = vpack.c.b16 %v296, %v295
      %v323 = vpack.c.b16 %v298, %v297
      %v324 = vpack.c.b16 %v300, %v299
      %v325 = vpack.c.b16 %v302, %v301
      %v326 = vpack.c.b16 %v304, %v303
      %v327 = vpack.c.b16 %v306, %v305
      %v328 = vpack.c.b16 %v308, %v307
      %v329 = vpack.c.b16 %v310, %v309
      %v330 = vpack.c.b16 %v312, %v311
      %v331 = vpack.c.b16 %v314, %v313
      %v332 = vpack.c.b16 %v316, %v315
      %v349 = vunpack.c.l.b16 %v201
      %v350 = vunpack.c.l.b16 %v204
      %v351 = vunpack.c.l.b16 %v207
      %v352 = vunpack.c.l.b16 %v210
      %v353 = vunpack.c.l.b16 %v213
      %v354 = vunpack.c.l.b16 %v216
      %v355 = vunpack.c.l.b16 %v219
      %v356 = vunpack.c.l.b16 %v222
      %v357 = vunpack.c.l.b16 %v225
      %v358 = vunpack.c.l.b16 %v228
      %v359 = vunpack.c.l.b16 %v231
      %v360 = vunpack.c.l.b16 %v234
      %v361 = vunpack.c.l.b16 %v237
      %v362 = vunpack.c.l.b16 %v240
      %v363 = vunpack.c.l.b16 %v243
      %v364 = vunpack.c.l.b16 %v246
      %v365 = vpack.c.b16 %v349, %v349
      %v366 = vpack.c.b16 %v350, %v350
      %v367 = vpack.c.b16 %v351, %v351
      %v368 = vpack.c.b16 %v352, %v352
      %v369 = vpack.c.b16 %v353, %v353
      %v370 = vpack.c.b16 %v354, %v354
      %v371 = vpack.c.b16 %v355, %v355
      %v372 = vpack.c.b16 %v356, %v356
      %v373 = vpack.c.b16 %v357, %v357
      %v374 = vpack.c.b16 %v358, %v358
      %v375 = vpack.c.b16 %v359, %v359
      %v376 = vpack.c.b16 %v360, %v360
      %v377 = vpack.c.b16 %v361, %v361
      %v378 = vpack.c.b16 %v362, %v362
      %v379 = vpack.c.b16 %v363, %v363
      %v380 = vpack.c.b16 %v364, %v364
      %vm381 = vsmask.f32 7424
      %v383 = vshrl.u32 %v317, 16
      %v385 = vshll.u32 %v317, 16
      %v387 = vrot.slane %v385, 1
      %v388 = vor.u32 %v383, %v387
      %v390 = vshll.u32 %v365, 16
      %v392 = vrot.slane %v390, 1
      %v393 = vsel %vm381, %v388, %v392
      %v395 = vshrl.u32 %v318, 16
      %v397 = vshll.u32 %v318, 16
      %v399 = vrot.slane %v397, 1
      %v400 = vor.u32 %v395, %v399
      %v402 = vshll.u32 %v366, 16
      %v404 = vrot.slane %v402, 1
      %v405 = vsel %vm381, %v400, %v404
      %v407 = vshrl.u32 %v319, 16
      %v409 = vshll.u32 %v319, 16
      %v411 = vrot.slane %v409, 1
      %v412 = vor.u32 %v407, %v411
      %v414 = vshll.u32 %v367, 16
      %v416 = vrot.slane %v414, 1
      %v417 = vsel %vm381, %v412, %v416
      %v419 = vshrl.u32 %v320, 16
      %v421 = vshll.u32 %v320, 16
      %v423 = vrot.slane %v421, 1
      %v424 = vor.u32 %v419, %v423
      %v426 = vshll.u32 %v368, 16
      %v428 = vrot.slane %v426, 1
      %v429 = vsel %vm381, %v424, %v428
      %v431 = vshrl.u32 %v321, 16
      %v433 = vshll.u32 %v321, 16
      %v435 = vrot.slane %v433, 1
      %v436 = vor.u32 %v431, %v435
      %v438 = vshll.u32 %v369, 16
      %v440 = vrot.slane %v438, 1
      %v441 = vsel %vm381, %v436, %v440
      %v443 = vshrl.u32 %v322, 16
      %v445 = vshll.u32 %v322, 16
      %v447 = vrot.slane %v445, 1
      %v448 = vor.u32 %v443, %v447
      %v450 = vshll.u32 %v370, 16
      %v452 = vrot.slane %v450, 1
      %v453 = vsel %vm381, %v448, %v452
      %v455 = vshrl.u32 %v323, 16
      %v457 = vshll.u32 %v323, 16
      %v459 = vrot.slane %v457, 1
      %v460 = vor.u32 %v455, %v459
      %v462 = vshll.u32 %v371, 16
      %v464 = vrot.slane %v462, 1
      %v465 = vsel %vm381, %v460, %v464
      %v467 = vshrl.u32 %v324, 16
      %v469 = vshll.u32 %v324, 16
      %v471 = vrot.slane %v469, 1
      %v472 = vor.u32 %v467, %v471
      %v474 = vshll.u32 %v372, 16
      %v476 = vrot.slane %v474, 1
      %v477 = vsel %vm381, %v472, %v476
      %v479 = vshrl.u32 %v325, 16
      %v481 = vshll.u32 %v325, 16
      %v483 = vrot.slane %v481, 1
      %v484 = vor.u32 %v479, %v483
      %v486 = vshll.u32 %v373, 16
      %v488 = vrot.slane %v486, 1
      %v489 = vsel %vm381, %v484, %v488
      %v491 = vshrl.u32 %v326, 16
      %v493 = vshll.u32 %v326, 16
      %v495 = vrot.slane %v493, 1
      %v496 = vor.u32 %v491, %v495
      %v498 = vshll.u32 %v374, 16
      %v500 = vrot.slane %v498, 1
      %v501 = vsel %vm381, %v496, %v500
      %v503 = vshrl.u32 %v327, 16
      %v505 = vshll.u32 %v327, 16
      %v507 = vrot.slane %v505, 1
      %v508 = vor.u32 %v503, %v507
      %v510 = vshll.u32 %v375, 16
      %v512 = vrot.slane %v510, 1
      %v513 = vsel %vm381, %v508, %v512
      %v515 = vshrl.u32 %v328, 16
      %v517 = vshll.u32 %v328, 16
      %v519 = vrot.slane %v517, 1
      %v520 = vor.u32 %v515, %v519
      %v522 = vshll.u32 %v376, 16
      %v524 = vrot.slane %v522, 1
      %v525 = vsel %vm381, %v520, %v524
      %v527 = vshrl.u32 %v329, 16
      %v529 = vshll.u32 %v329, 16
      %v531 = vrot.slane %v529, 1
      %v532 = vor.u32 %v527, %v531
      %v534 = vshll.u32 %v377, 16
      %v536 = vrot.slane %v534, 1
      %v537 = vsel %vm381, %v532, %v536
      %v539 = vshrl.u32 %v330, 16
      %v541 = vshll.u32 %v330, 16
      %v543 = vrot.slane %v541, 1
      %v544 = vor.u32 %v539, %v543
      %v546 = vshll.u32 %v378, 16
      %v548 = vrot.slane %v546, 1
      %v549 = vsel %vm381, %v544, %v548
      %v551 = vshrl.u32 %v331, 16
      %v553 = vshll.u32 %v331, 16
      %v555 = vrot.slane %v553, 1
      %v556 = vor.u32 %v551, %v555
      %v558 = vshll.u32 %v379, 16
      %v560 = vrot.slane %v558, 1
      %v561 = vsel %vm381, %v556, %v560
      %v563 = vshrl.u32 %v332, 16
      %v565 = vshll.u32 %v332, 16
      %v567 = vrot.slane %v565, 1
      %v568 = vor.u32 %v563, %v567
      %v570 = vshll.u32 %v380, 16
      %v572 = vrot.slane %v570, 1
      %v573 = vsel %vm381, %v568, %v572
      %574 = vrot.lane.b32.xlu0 %v393, 8
      %v575 = vpop.permute.xlu0 %574
      %576 = vrot.lane.b32.xlu0 %v405, 8
      %v577 = vpop.permute.xlu0 %576
      %578 = vrot.lane.b32.xlu0 %v417, 8
      %v579 = vpop.permute.xlu0 %578
      %580 = vrot.lane.b32.xlu0 %v429, 8
      %v581 = vpop.permute.xlu0 %580
      %582 = vrot.lane.b32.xlu0 %v441, 8
      %v583 = vpop.permute.xlu0 %582
      %584 = vrot.lane.b32.xlu0 %v453, 8
      %v585 = vpop.permute.xlu0 %584
      %586 = vrot.lane.b32.xlu0 %v465, 8
      %v587 = vpop.permute.xlu0 %586
      %588 = vrot.lane.b32.xlu0 %v477, 8
      %v589 = vpop.permute.xlu0 %588
      %590 = vrot.lane.b32.xlu0 %v489, 8
      %v591 = vpop.permute.xlu0 %590
      %592 = vrot.lane.b32.xlu0 %v501, 8
      %v593 = vpop.permute.xlu0 %592
      %594 = vrot.lane.b32.xlu0 %v513, 8
      %v595 = vpop.permute.xlu0 %594
      %596 = vrot.lane.b32.xlu0 %v525, 8
      %v597 = vpop.permute.xlu0 %596
      %598 = vrot.lane.b32.xlu0 %v537, 8
      %v599 = vpop.permute.xlu0 %598
      %600 = vrot.lane.b32.xlu0 %v549, 8
      %v601 = vpop.permute.xlu0 %600
      %602 = vrot.lane.b32.xlu0 %v561, 8
      %v603 = vpop.permute.xlu0 %602
      %604 = vrot.lane.b32.xlu0 %v573, 8
      %v605 = vpop.permute.xlu0 %604
      %vm606 = vcmask 1046528
      %v607 = vrot.slane %v317, 1
      %v608 = vrot.slane %v365, 1
      %v609 = vsel %vm606, %v607, %v608
      %v610 = vrot.slane %v318, 1
      %v611 = vrot.slane %v366, 1
      %v612 = vsel %vm606, %v610, %v611
      %v613 = vrot.slane %v319, 1
      %v614 = vrot.slane %v367, 1
      %v615 = vsel %vm606, %v613, %v614
      %v616 = vrot.slane %v320, 1
      %v617 = vrot.slane %v368, 1
      %v618 = vsel %vm606, %v616, %v617
      %v619 = vrot.slane %v321, 1
      %v620 = vrot.slane %v369, 1
      %v621 = vsel %vm606, %v619, %v620
      %v622 = vrot.slane %v322, 1
      %v623 = vrot.slane %v370, 1
      %v624 = vsel %vm606, %v622, %v623
      %v625 = vrot.slane %v323, 1
      %v626 = vrot.slane %v371, 1
      %v627 = vsel %vm606, %v625, %v626
      %v628 = vrot.slane %v324, 1
      %v629 = vrot.slane %v372, 1
      %v630 = vsel %vm606, %v628, %v629
      %v631 = vrot.slane %v325, 1
      %v632 = vrot.slane %v373, 1
      %v633 = vsel %vm606, %v631, %v632
      %v634 = vrot.slane %v326, 1
      %v635 = vrot.slane %v374, 1
      %v636 = vsel %vm606, %v634, %v635
      %v637 = vrot.slane %v327, 1
      %v638 = vrot.slane %v375, 1
      %v639 = vsel %vm606, %v637, %v638
      %v640 = vrot.slane %v328, 1
      %v641 = vrot.slane %v376, 1
      %v642 = vsel %vm606, %v640, %v641
      %v643 = vrot.slane %v329, 1
      %v644 = vrot.slane %v377, 1
      %v645 = vsel %vm606, %v643, %v644
      %v646 = vrot.slane %v330, 1
      %v647 = vrot.slane %v378, 1
      %v648 = vsel %vm606, %v646, %v647
      %v649 = vrot.slane %v331, 1
      %v650 = vrot.slane %v379, 1
      %v651 = vsel %vm606, %v649, %v650
      %v652 = vrot.slane %v332, 1
      %v653 = vrot.slane %v380, 1
      %v654 = vsel %vm606, %v652, %v653
      %655 = vrot.lane.b32.xlu0 %v609, 16
      %v656 = vpop.permute.xlu0 %655
      %657 = vrot.lane.b32.xlu0 %v612, 16
      %v658 = vpop.permute.xlu0 %657
      %659 = vrot.lane.b32.xlu0 %v615, 16
      %v660 = vpop.permute.xlu0 %659
      %661 = vrot.lane.b32.xlu0 %v618, 16
      %v662 = vpop.permute.xlu0 %661
      %663 = vrot.lane.b32.xlu0 %v621, 16
      %v664 = vpop.permute.xlu0 %663
      %665 = vrot.lane.b32.xlu0 %v624, 16
      %v666 = vpop.permute.xlu0 %665
      %667 = vrot.lane.b32.xlu0 %v627, 16
      %v668 = vpop.permute.xlu0 %667
      %669 = vrot.lane.b32.xlu0 %v630, 16
      %v670 = vpop.permute.xlu0 %669
      %671 = vrot.lane.b32.xlu0 %v633, 16
      %v672 = vpop.permute.xlu0 %671
      %673 = vrot.lane.b32.xlu0 %v636, 16
      %v674 = vpop.permute.xlu0 %673
      %675 = vrot.lane.b32.xlu0 %v639, 16
      %v676 = vpop.permute.xlu0 %675
      %677 = vrot.lane.b32.xlu0 %v642, 16
      %v678 = vpop.permute.xlu0 %677
      %679 = vrot.lane.b32.xlu0 %v645, 16
      %v680 = vpop.permute.xlu0 %679
      %681 = vrot.lane.b32.xlu0 %v648, 16
      %v682 = vpop.permute.xlu0 %681
      %683 = vrot.lane.b32.xlu0 %v651, 16
      %v684 = vpop.permute.xlu0 %683
      %685 = vrot.lane.b32.xlu0 %v654, 16
      %v686 = vpop.permute.xlu0 %685
      %v689 = vunpack.c.l.b16 %v247
      %v690 = vunpack.c.l.b16 %v248
      %v691 = vpack.c.b16 %v690, %v689
      %692 = vrot.lane.b32.xlu0 %v318, 24
      %v693 = vpop.permute.xlu0 %692
      %694 = vrot.lane.b32.xlu0 %v319, 24
      %v695 = vpop.permute.xlu0 %694
      %696 = vrot.lane.b32.xlu0 %v320, 24
      %v697 = vpop.permute.xlu0 %696
      %698 = vrot.lane.b32.xlu0 %v321, 24
      %v699 = vpop.permute.xlu0 %698
      %700 = vrot.lane.b32.xlu0 %v322, 24
      %v701 = vpop.permute.xlu0 %700
      %702 = vrot.lane.b32.xlu0 %v323, 24
      %v703 = vpop.permute.xlu0 %702
      %704 = vrot.lane.b32.xlu0 %v324, 24
      %v705 = vpop.permute.xlu0 %704
      %706 = vrot.lane.b32.xlu0 %v325, 24
      %v707 = vpop.permute.xlu0 %706
      %708 = vrot.lane.b32.xlu0 %v326, 24
      %v709 = vpop.permute.xlu0 %708
      %710 = vrot.lane.b32.xlu0 %v327, 24
      %v711 = vpop.permute.xlu0 %710
      %712 = vrot.lane.b32.xlu0 %v328, 24
      %v713 = vpop.permute.xlu0 %712
      %714 = vrot.lane.b32.xlu0 %v329, 24
      %v715 = vpop.permute.xlu0 %714
      %716 = vrot.lane.b32.xlu0 %v330, 24
      %v717 = vpop.permute.xlu0 %716
      %718 = vrot.lane.b32.xlu0 %v331, 24
      %v719 = vpop.permute.xlu0 %718
      %720 = vrot.lane.b32.xlu0 %v332, 24
      %v721 = vpop.permute.xlu0 %720
      %722 = vrot.lane.b32.xlu0 %v691, 24
      %v723 = vpop.permute.xlu0 %722
      %v725 = vunpack.c.l.b16 %v249
      %v726 = vpack.c.b16 %v725, %v725
      %v728 = vshrl.u32 %v691, 16
      %v730 = vshll.u32 %v691, 16
      %v732 = vrot.slane %v730, 1
      %v733 = vor.u32 %v728, %v732
      %v735 = vshll.u32 %v726, 16
      %v737 = vrot.slane %v735, 1
      %v738 = vsel %vm381, %v733, %v737
      %739 = vrot.lane.b32.xlu0 %v405, 32
      %v740 = vpop.permute.xlu0 %739
      %741 = vrot.lane.b32.xlu0 %v417, 32
      %v742 = vpop.permute.xlu0 %741
      %743 = vrot.lane.b32.xlu0 %v429, 32
      %v744 = vpop.permute.xlu0 %743
      %745 = vrot.lane.b32.xlu0 %v441, 32
      %v746 = vpop.permute.xlu0 %745
      %747 = vrot.lane.b32.xlu0 %v453, 32
      %v748 = vpop.permute.xlu0 %747
      %749 = vrot.lane.b32.xlu0 %v465, 32
      %v750 = vpop.permute.xlu0 %749
      %751 = vrot.lane.b32.xlu0 %v477, 32
      %v752 = vpop.permute.xlu0 %751
      %753 = vrot.lane.b32.xlu0 %v489, 32
      %v754 = vpop.permute.xlu0 %753
      %755 = vrot.lane.b32.xlu0 %v501, 32
      %v756 = vpop.permute.xlu0 %755
      %757 = vrot.lane.b32.xlu0 %v513, 32
      %v758 = vpop.permute.xlu0 %757
      %759 = vrot.lane.b32.xlu0 %v525, 32
      %v760 = vpop.permute.xlu0 %759
      %761 = vrot.lane.b32.xlu0 %v537, 32
      %v762 = vpop.permute.xlu0 %761
      %763 = vrot.lane.b32.xlu0 %v549, 32
      %v764 = vpop.permute.xlu0 %763
      %765 = vrot.lane.b32.xlu0 %v561, 32
      %v766 = vpop.permute.xlu0 %765
      %767 = vrot.lane.b32.xlu0 %v573, 32
      %v768 = vpop.permute.xlu0 %767
      %769 = vrot.lane.b32.xlu0 %v738, 32
      %v770 = vpop.permute.xlu0 %769
      %v771 = vrot.slane %v691, 1
      %v772 = vrot.slane %v726, 1
      %v773 = vsel %vm606, %v771, %v772
      %774 = vrot.lane.b32.xlu0 %v612, 40
      %v775 = vpop.permute.xlu0 %774
      %776 = vrot.lane.b32.xlu0 %v615, 40
      %v777 = vpop.permute.xlu0 %776
      %778 = vrot.lane.b32.xlu0 %v618, 40
      %v779 = vpop.permute.xlu0 %778
      %780 = vrot.lane.b32.xlu0 %v621, 40
      %v781 = vpop.permute.xlu0 %780
      %782 = vrot.lane.b32.xlu0 %v624, 40
      %v783 = vpop.permute.xlu0 %782
      %784 = vrot.lane.b32.xlu0 %v627, 40
      %v785 = vpop.permute.xlu0 %784
      %786 = vrot.lane.b32.xlu0 %v630, 40
      %v787 = vpop.permute.xlu0 %786
      %788 = vrot.lane.b32.xlu0 %v633, 40
      %v789 = vpop.permute.xlu0 %788
      %790 = vrot.lane.b32.xlu0 %v636, 40
      %v791 = vpop.permute.xlu0 %790
      %792 = vrot.lane.b32.xlu0 %v639, 40
      %v793 = vpop.permute.xlu0 %792
      %794 = vrot.lane.b32.xlu0 %v642, 40
      %v795 = vpop.permute.xlu0 %794
      %796 = vrot.lane.b32.xlu0 %v645, 40
      %v797 = vpop.permute.xlu0 %796
      %798 = vrot.lane.b32.xlu0 %v648, 40
      %v799 = vpop.permute.xlu0 %798
      %800 = vrot.lane.b32.xlu0 %v651, 40
      %v801 = vpop.permute.xlu0 %800
      %802 = vrot.lane.b32.xlu0 %v654, 40
      %v803 = vpop.permute.xlu0 %802
      %804 = vrot.lane.b32.xlu0 %v773, 40
      %v805 = vpop.permute.xlu0 %804
      %v808 = vunpack.c.l.b16 %v250
      %v809 = vunpack.c.l.b16 %v251
      %v810 = vpack.c.b16 %v809, %v808
      %811 = vrot.lane.b32.xlu0 %v319, 48
      %v812 = vpop.permute.xlu0 %811
      %813 = vrot.lane.b32.xlu0 %v320, 48
      %v814 = vpop.permute.xlu0 %813
      %815 = vrot.lane.b32.xlu0 %v321, 48
      %v816 = vpop.permute.xlu0 %815
      %817 = vrot.lane.b32.xlu0 %v322, 48
      %v818 = vpop.permute.xlu0 %817
      %819 = vrot.lane.b32.xlu0 %v323, 48
      %v820 = vpop.permute.xlu0 %819
      %821 = vrot.lane.b32.xlu0 %v324, 48
      %v822 = vpop.permute.xlu0 %821
      %823 = vrot.lane.b32.xlu0 %v325, 48
      %v824 = vpop.permute.xlu0 %823
      %825 = vrot.lane.b32.xlu0 %v326, 48
      %v826 = vpop.permute.xlu0 %825
      %827 = vrot.lane.b32.xlu0 %v327, 48
      %v828 = vpop.permute.xlu0 %827
      %829 = vrot.lane.b32.xlu0 %v328, 48
      %v830 = vpop.permute.xlu0 %829
      %831 = vrot.lane.b32.xlu0 %v329, 48
      %v832 = vpop.permute.xlu0 %831
      %833 = vrot.lane.b32.xlu0 %v330, 48
      %v834 = vpop.permute.xlu0 %833
      %835 = vrot.lane.b32.xlu0 %v331, 48
      %v836 = vpop.permute.xlu0 %835
      %837 = vrot.lane.b32.xlu0 %v332, 48
      %v838 = vpop.permute.xlu0 %837
      %839 = vrot.lane.b32.xlu0 %v691, 48
      %v840 = vpop.permute.xlu0 %839
      %841 = vrot.lane.b32.xlu0 %v810, 48
      %v842 = vpop.permute.xlu0 %841
      %v844 = vunpack.c.l.b16 %v252
      %v845 = vpack.c.b16 %v844, %v844
      %v847 = vshrl.u32 %v810, 16
      %v849 = vshll.u32 %v810, 16
      %v851 = vrot.slane %v849, 1
      %v852 = vor.u32 %v847, %v851
      %v854 = vshll.u32 %v845, 16
      %v856 = vrot.slane %v854, 1
      %v857 = vsel %vm381, %v852, %v856
      %858 = vrot.lane.b32.xlu0 %v417, 56
      %v859 = vpop.permute.xlu0 %858
      %860 = vrot.lane.b32.xlu0 %v429, 56
      %v861 = vpop.permute.xlu0 %860
      %862 = vrot.lane.b32.xlu0 %v441, 56
      %v863 = vpop.permute.xlu0 %862
      %864 = vrot.lane.b32.xlu0 %v453, 56
      %v865 = vpop.permute.xlu0 %864
      %866 = vrot.lane.b32.xlu0 %v465, 56
      %v867 = vpop.permute.xlu0 %866
      %868 = vrot.lane.b32.xlu0 %v477, 56
      %v869 = vpop.permute.xlu0 %868
      %870 = vrot.lane.b32.xlu0 %v489, 56
      %v871 = vpop.permute.xlu0 %870
      %872 = vrot.lane.b32.xlu0 %v501, 56
      %v873 = vpop.permute.xlu0 %872
      %874 = vrot.lane.b32.xlu0 %v513, 56
      %v875 = vpop.permute.xlu0 %874
      %876 = vrot.lane.b32.xlu0 %v525, 56
      %v877 = vpop.permute.xlu0 %876
      %878 = vrot.lane.b32.xlu0 %v537, 56
      %v879 = vpop.permute.xlu0 %878
      %880 = vrot.lane.b32.xlu0 %v549, 56
      %v881 = vpop.permute.xlu0 %880
      %882 = vrot.lane.b32.xlu0 %v561, 56
      %v883 = vpop.permute.xlu0 %882
      %884 = vrot.lane.b32.xlu0 %v573, 56
      %v885 = vpop.permute.xlu0 %884
      %886 = vrot.lane.b32.xlu0 %v738, 56
      %v887 = vpop.permute.xlu0 %886
      %888 = vrot.lane.b32.xlu0 %v857, 56
      %v889 = vpop.permute.xlu0 %888
      %v890 = vrot.slane %v810, 1
      %v891 = vrot.slane %v845, 1
      %v892 = vsel %vm606, %v890, %v891
      %893 = vrot.lane.b32.xlu0 %v615, 64
      %v894 = vpop.permute.xlu0 %893
      %895 = vrot.lane.b32.xlu0 %v618, 64
      %v896 = vpop.permute.xlu0 %895
      %897 = vrot.lane.b32.xlu0 %v621, 64
      %v898 = vpop.permute.xlu0 %897
      %899 = vrot.lane.b32.xlu0 %v624, 64
      %v900 = vpop.permute.xlu0 %899
      %901 = vrot.lane.b32.xlu0 %v627, 64
      %v902 = vpop.permute.xlu0 %901
      %903 = vrot.lane.b32.xlu0 %v630, 64
      %v904 = vpop.permute.xlu0 %903
      %905 = vrot.lane.b32.xlu0 %v633, 64
      %v906 = vpop.permute.xlu0 %905
      %907 = vrot.lane.b32.xlu0 %v636, 64
      %v908 = vpop.permute.xlu0 %907
      %909 = vrot.lane.b32.xlu0 %v639, 64
      %v910 = vpop.permute.xlu0 %909
      %911 = vrot.lane.b32.xlu0 %v642, 64
      %v912 = vpop.permute.xlu0 %911
      %913 = vrot.lane.b32.xlu0 %v645, 64
      %v914 = vpop.permute.xlu0 %913
      %915 = vrot.lane.b32.xlu0 %v648, 64
      %v916 = vpop.permute.xlu0 %915
      %917 = vrot.lane.b32.xlu0 %v651, 64
      %v918 = vpop.permute.xlu0 %917
      %919 = vrot.lane.b32.xlu0 %v654, 64
      %v920 = vpop.permute.xlu0 %919
      %921 = vrot.lane.b32.xlu0 %v773, 64
      %v922 = vpop.permute.xlu0 %921
      %923 = vrot.lane.b32.xlu0 %v892, 64
      %v924 = vpop.permute.xlu0 %923
      %vm925 = vcmask 64512
      %v927 = vsel %vm925, %v317, %v575
      %v929 = vsel %vm925, %v318, %v577
      %v931 = vsel %vm925, %v319, %v579
      %v933 = vsel %vm925, %v320, %v581
      %v935 = vsel %vm925, %v321, %v583
      %v937 = vsel %vm925, %v322, %v585
      %v939 = vsel %vm925, %v323, %v587
      %v941 = vsel %vm925, %v324, %v589
      %v943 = vsel %vm925, %v325, %v591
      %v945 = vsel %vm925, %v326, %v593
      %v947 = vsel %vm925, %v327, %v595
      %v949 = vsel %vm925, %v328, %v597
      %v951 = vsel %vm925, %v329, %v599
      %v953 = vsel %vm925, %v330, %v601
      %v955 = vsel %vm925, %v331, %v603
      %v957 = vsel %vm925, %v332, %v605
      %vm958 = vcmask 130048
      %v960 = vsel %vm958, %v927, %v656
      %v962 = vsel %vm958, %v929, %v658
      %v964 = vsel %vm958, %v931, %v660
      %v966 = vsel %vm958, %v933, %v662
      %v968 = vsel %vm958, %v935, %v664
      %v970 = vsel %vm958, %v937, %v666
      %v972 = vsel %vm958, %v939, %v668
      %v974 = vsel %vm958, %v941, %v670
      %v976 = vsel %vm958, %v943, %v672
      %v978 = vsel %vm958, %v945, %v674
      %v980 = vsel %vm958, %v947, %v676
      %v982 = vsel %vm958, %v949, %v678
      %v984 = vsel %vm958, %v951, %v680
      %v986 = vsel %vm958, %v953, %v682
      %v988 = vsel %vm958, %v955, %v684
      %v990 = vsel %vm958, %v957, %v686
      %vm991 = vcmask 195584
      %v993 = vsel %vm991, %v960, %v693
      %v995 = vsel %vm991, %v962, %v695
      %v997 = vsel %vm991, %v964, %v697
      %v999 = vsel %vm991, %v966, %v699
      %v1001 = vsel %vm991, %v968, %v701
      %v1003 = vsel %vm991, %v970, %v703
      %v1005 = vsel %vm991, %v972, %v705
      %v1007 = vsel %vm991, %v974, %v707
      %v1009 = vsel %vm991, %v976, %v709
      %v1011 = vsel %vm991, %v978, %v711
      %v1013 = vsel %vm991, %v980, %v713
      %v1015 = vsel %vm991, %v982, %v715
      %v1017 = vsel %vm991, %v984, %v717
      %v1019 = vsel %vm991, %v986, %v719
      %v1021 = vsel %vm991, %v988, %v721
      %v1023 = vsel %vm991, %v990, %v723
      %vm1024 = vcmask 261120
      %v1026 = vsel %vm1024, %v993, %v740
      %v1028 = vsel %vm1024, %v995, %v742
      %v1030 = vsel %vm1024, %v997, %v744
      %v1032 = vsel %vm1024, %v999, %v746
      %v1034 = vsel %vm1024, %v1001, %v748
      %v1036 = vsel %vm1024, %v1003, %v750
      %v1038 = vsel %vm1024, %v1005, %v752
      %v1040 = vsel %vm1024, %v1007, %v754
      %v1042 = vsel %vm1024, %v1009, %v756
      %v1044 = vsel %vm1024, %v1011, %v758
      %v1046 = vsel %vm1024, %v1013, %v760
      %v1048 = vsel %vm1024, %v1015, %v762
      %v1050 = vsel %vm1024, %v1017, %v764
      %v1052 = vsel %vm1024, %v1019, %v766
      %v1054 = vsel %vm1024, %v1021, %v768
      %v1056 = vsel %vm1024, %v1023, %v770
      %vm1057 = vcmask 326656
      %v1059 = vsel %vm1057, %v1026, %v775
      %v1061 = vsel %vm1057, %v1028, %v777
      %v1063 = vsel %vm1057, %v1030, %v779
      %v1065 = vsel %vm1057, %v1032, %v781
      %v1067 = vsel %vm1057, %v1034, %v783
      %v1069 = vsel %vm1057, %v1036, %v785
      %v1071 = vsel %vm1057, %v1038, %v787
      %v1073 = vsel %vm1057, %v1040, %v789
      %v1075 = vsel %vm1057, %v1042, %v791
      %v1077 = vsel %vm1057, %v1044, %v793
      %v1079 = vsel %vm1057, %v1046, %v795
      %v1081 = vsel %vm1057, %v1048, %v797
      %v1083 = vsel %vm1057, %v1050, %v799
      %v1085 = vsel %vm1057, %v1052, %v801
      %v1087 = vsel %vm1057, %v1054, %v803
      %v1089 = vsel %vm1057, %v1056, %v805
      %vm1090 = vcmask 392192
      %v1092 = vsel %vm1090, %v1059, %v812
      %v1094 = vsel %vm1090, %v1061, %v814
      %v1096 = vsel %vm1090, %v1063, %v816
      %v1098 = vsel %vm1090, %v1065, %v818
      %v1100 = vsel %vm1090, %v1067, %v820
      %v1102 = vsel %vm1090, %v1069, %v822
      %v1104 = vsel %vm1090, %v1071, %v824
      %v1106 = vsel %vm1090, %v1073, %v826
      %v1108 = vsel %vm1090, %v1075, %v828
      %v1110 = vsel %vm1090, %v1077, %v830
      %v1112 = vsel %vm1090, %v1079, %v832
      %v1114 = vsel %vm1090, %v1081, %v834
      %v1116 = vsel %vm1090, %v1083, %v836
      %v1118 = vsel %vm1090, %v1085, %v838
      %v1120 = vsel %vm1090, %v1087, %v840
      %v1122 = vsel %vm1090, %v1089, %v842
      %vm1123 = vcmask 457728
      %v1125 = vsel %vm1123, %v1092, %v859
      %v1127 = vsel %vm1123, %v1094, %v861
      %v1129 = vsel %vm1123, %v1096, %v863
      %v1131 = vsel %vm1123, %v1098, %v865
      %v1133 = vsel %vm1123, %v1100, %v867
      %v1135 = vsel %vm1123, %v1102, %v869
      %v1137 = vsel %vm1123, %v1104, %v871
      %v1139 = vsel %vm1123, %v1106, %v873
      %v1141 = vsel %vm1123, %v1108, %v875
      %v1143 = vsel %vm1123, %v1110, %v877
      %v1145 = vsel %vm1123, %v1112, %v879
      %v1147 = vsel %vm1123, %v1114, %v881
      %v1149 = vsel %vm1123, %v1116, %v883
      %v1151 = vsel %vm1123, %v1118, %v885
      %v1153 = vsel %vm1123, %v1120, %v887
      %v1155 = vsel %vm1123, %v1122, %v889
      %vm1156 = vcmask 523264
      %v1158 = vsel %vm1156, %v1125, %v894
      %v1160 = vsel %vm1156, %v1127, %v896
      %v1162 = vsel %vm1156, %v1129, %v898
      %v1164 = vsel %vm1156, %v1131, %v900
      %v1166 = vsel %vm1156, %v1133, %v902
      %v1168 = vsel %vm1156, %v1135, %v904
      %v1170 = vsel %vm1156, %v1137, %v906
      %v1172 = vsel %vm1156, %v1139, %v908
      %v1174 = vsel %vm1156, %v1141, %v910
      %v1176 = vsel %vm1156, %v1143, %v912
      %v1178 = vsel %vm1156, %v1145, %v914
      %v1180 = vsel %vm1156, %v1147, %v916
      %v1182 = vsel %vm1156, %v1149, %v918
      %v1184 = vsel %vm1156, %v1151, %v920
      %v1186 = vsel %vm1156, %v1153, %v922
      %v1188 = vsel %vm1156, %v1155, %v924
      %v1189 = vld [vmem:[%s1] sm:$0xf]
      %v1190 = vld [vmem:[%s1 + $0x4] sm:$0xf]
      %v1191 = vld [vmem:[%s1 + $0x8] sm:$0xf]
      %v1192 = vld [vmem:[%s1 + $0xc] sm:$0xf]
      %v1193 = vld [vmem:[%s1 + $0x10] sm:$0xf]
      %v1194 = vld [vmem:[%s1 + $0x14] sm:$0xf]
      %v1195 = vld [vmem:[%s1 + $0x18] sm:$0xf]
      %v1196 = vld [vmem:[%s1 + $0x1c] sm:$0xf]
      %v1197 = vld [vmem:[%s1 + $0x20] sm:$0xf]
      %v1198 = vld [vmem:[%s2] sm:$0x1]
      %v1200 = vperm.slane %v1198, 0
      %v1211 = vunpack.c.l.b16 %v1189
      %v1212 = vunpack.c.l.b16 %v1190
      %v1213 = vunpack.c.l.b16 %v1191
      %v1214 = vunpack.c.l.b16 %v1192
      %v1215 = vunpack.c.l.b16 %v1193
      %v1216 = vunpack.c.l.b16 %v1194
      %v1217 = vunpack.c.l.b16 %v1195
      %v1218 = vunpack.c.l.b16 %v1196
      %v1219 = vunpack.c.l.b16 %v1197
      %v1220 = vpack.c.b16 %v1212, %v1211
      %v1221 = vpack.c.b16 %v1214, %v1213
      %v1222 = vpack.c.b16 %v1216, %v1215
      %v1223 = vpack.c.b16 %v1218, %v1217
      %v1224 = vpack.c.b16 %v1219, %v1219
      %vm1229 = vcmask 588800
      %v1230 = vsel %vm1229, %v1158, 0
      %v1232 = vsel %vm1229, %v1160, 0
      %v1234 = vsel %vm1229, %v1162, 0
      %v1236 = vsel %vm1229, %v1164, 0
      %v1238 = vsel %vm1229, %v1166, 0
      %v1240 = vsel %vm1229, %v1168, 0
      %v1242 = vsel %vm1229, %v1170, 0
      %v1244 = vsel %vm1229, %v1172, 0
      %v1246 = vsel %vm1229, %v1174, 0
      %v1248 = vsel %vm1229, %v1176, 0
      %v1250 = vsel %vm1229, %v1178, 0
      %v1252 = vsel %vm1229, %v1180, 0
      %v1254 = vsel %vm1229, %v1182, 0
      %v1256 = vsel %vm1229, %v1184, 0
      %v1258 = vsel %vm1229, %v1186, 0
      %v1260 = vsel %vm1229, %v1188, 0
      %vm1262 = vcmask 1043456
      %v1264 = vsel %vm1262, %v1224, 0
      %1266 = vmatpush.bf16.msra.mxu0 0
      %1267 = vmatpush.bf16.msra.mxu0 0
      %1268 = vmatpush.bf16.msra.mxu0 0
      %1269 = vmatpush.bf16.msra.mxu0 %v1264
      %1270 = vmatpush.bf16.msra.mxu0 %v1223
      %1271 = vmatpush.bf16.msra.mxu0 %v1222
      %1272 = vmatpush.bf16.msra.mxu0 %v1221
      %1273 = vmatpush.bf16.msra.mxu0 %v1220
      %1274 = vmatmul.bf16.gmra.mxu0 %v1230
      %v1275 = vpop.f32.mrf.mxu0
      %v1276 = vadd.f32 %v1200, %v1275
      %v1277 = vpop.f32.mrf.mxu0
      %v1278 = vadd.f32 %v1200, %v1277
      %1279 = vmatmul.bf16.gmra.mxu0 %v1232
      %v1280 = vpop.f32.mrf.mxu0
      %v1281 = vadd.f32 %v1200, %v1280
      %v1282 = vpop.f32.mrf.mxu0
      %v1283 = vadd.f32 %v1200, %v1282
      %1284 = vmatmul.bf16.gmra.mxu0 %v1234
      %v1285 = vpop.f32.mrf.mxu0
      %v1286 = vadd.f32 %v1200, %v1285
      %v1287 = vpop.f32.mrf.mxu0
      %v1288 = vadd.f32 %v1200, %v1287
      %1289 = vmatmul.bf16.gmra.mxu0 %v1236
      %v1290 = vpop.f32.mrf.mxu0
      %v1291 = vadd.f32 %v1200, %v1290
      %v1292 = vpop.f32.mrf.mxu0
      %v1293 = vadd.f32 %v1200, %v1292
      %1294 = vmatmul.bf16.gmra.mxu0 %v1238
      %v1295 = vpop.f32.mrf.mxu0
      %v1296 = vadd.f32 %v1200, %v1295
      %v1297 = vpop.f32.mrf.mxu0
      %v1298 = vadd.f32 %v1200, %v1297
      %1299 = vmatmul.bf16.gmra.mxu0 %v1240
      %v1300 = vpop.f32.mrf.mxu0
      %v1301 = vadd.f32 %v1200, %v1300
      %v1302 = vpop.f32.mrf.mxu0
      %v1303 = vadd.f32 %v1200, %v1302
      %1304 = vmatmul.bf16.gmra.mxu0 %v1242
      %v1305 = vpop.f32.mrf.mxu0
      %v1306 = vadd.f32 %v1200, %v1305
      %v1307 = vpop.f32.mrf.mxu0
      %v1308 = vadd.f32 %v1200, %v1307
      %1309 = vmatmul.bf16.gmra.mxu0 %v1244
      %v1310 = vpop.f32.mrf.mxu0
      %v1311 = vadd.f32 %v1200, %v1310
      %v1312 = vpop.f32.mrf.mxu0
      %v1313 = vadd.f32 %v1200, %v1312
      %1314 = vmatmul.bf16.gmra.mxu0 %v1246
      %v1315 = vpop.f32.mrf.mxu0
      %v1316 = vadd.f32 %v1200, %v1315
      %v1317 = vpop.f32.mrf.mxu0
      %v1318 = vadd.f32 %v1200, %v1317
      %1319 = vmatmul.bf16.gmra.mxu0 %v1248
      %v1320 = vpop.f32.mrf.mxu0
      %v1321 = vadd.f32 %v1200, %v1320
      %v1322 = vpop.f32.mrf.mxu0
      %v1323 = vadd.f32 %v1200, %v1322
      %1324 = vmatmul.bf16.gmra.mxu0 %v1250
      %v1325 = vpop.f32.mrf.mxu0
      %v1326 = vadd.f32 %v1200, %v1325
      %v1327 = vpop.f32.mrf.mxu0
      %v1328 = vadd.f32 %v1200, %v1327
      %1329 = vmatmul.bf16.gmra.mxu0 %v1252
      %v1330 = vpop.f32.mrf.mxu0
      %v1331 = vadd.f32 %v1200, %v1330
      %v1332 = vpop.f32.mrf.mxu0
      %v1333 = vadd.f32 %v1200, %v1332
      %1334 = vmatmul.bf16.gmra.mxu0 %v1254
      %v1335 = vpop.f32.mrf.mxu0
      %v1336 = vadd.f32 %v1200, %v1335
      %v1337 = vpop.f32.mrf.mxu0
      %v1338 = vadd.f32 %v1200, %v1337
      %1339 = vmatmul.bf16.gmra.mxu0 %v1256
      %v1340 = vpop.f32.mrf.mxu0
      %v1341 = vadd.f32 %v1200, %v1340
      %v1342 = vpop.f32.mrf.mxu0
      %v1343 = vadd.f32 %v1200, %v1342
      %1344 = vmatmul.bf16.gmra.mxu0 %v1258
      %v1345 = vpop.f32.mrf.mxu0
      %v1346 = vadd.f32 %v1200, %v1345
      %v1347 = vpop.f32.mrf.mxu0
      %v1348 = vadd.f32 %v1200, %v1347
      %1349 = vmatmul.bf16.gmra.mxu0 %v1260
      %v1350 = vpop.f32.mrf.mxu0
      %v1351 = vadd.f32 %v1200, %v1350
      %v1352 = vpop.f32.mrf.mxu0
      %v1353 = vadd.f32 %v1200, %v1352
      %1354 = vdwg.mxu0
      %v1355 = vmax.f32 %v1276, 0.0
      %v1356 = vmax.f32 %v1278, 0.0
      %v1357 = vmax.f32 %v1281, 0.0
      %v1358 = vmax.f32 %v1283, 0.0
      %v1359 = vmax.f32 %v1286, 0.0
      %v1360 = vmax.f32 %v1288, 0.0
      %v1361 = vmax.f32 %v1291, 0.0
      %v1362 = vmax.f32 %v1293, 0.0
      %v1363 = vmax.f32 %v1296, 0.0
      %v1364 = vmax.f32 %v1298, 0.0
      %v1365 = vmax.f32 %v1301, 0.0
      %v1366 = vmax.f32 %v1303, 0.0
      %v1367 = vmax.f32 %v1306, 0.0
      %v1368 = vmax.f32 %v1308, 0.0
      %v1369 = vmax.f32 %v1311, 0.0
      %v1370 = vmax.f32 %v1313, 0.0
      %v1371 = vmax.f32 %v1316, 0.0
      %v1372 = vmax.f32 %v1318, 0.0
      %v1373 = vmax.f32 %v1321, 0.0
      %v1374 = vmax.f32 %v1323, 0.0
      %v1375 = vmax.f32 %v1326, 0.0
      %v1376 = vmax.f32 %v1328, 0.0
      %v1377 = vmax.f32 %v1331, 0.0
      %v1378 = vmax.f32 %v1333, 0.0
      %v1379 = vmax.f32 %v1336, 0.0
      %v1380 = vmax.f32 %v1338, 0.0
      %v1381 = vmax.f32 %v1341, 0.0
      %v1382 = vmax.f32 %v1343, 0.0
      %v1383 = vmax.f32 %v1346, 0.0
      %v1384 = vmax.f32 %v1348, 0.0
      %v1385 = vmax.f32 %v1351, 0.0
      %v1386 = vmax.f32 %v1353, 0.0
      %1387 = vst.msk [vmem:[%s192] sm:$0xff] %vm925, %v1355
      %1388 = vst.msk [vmem:[%s192 + $0x8] sm:$0xff] %vm925, %v1356
      %1389 = vst.msk [vmem:[%s192 + $0x10] sm:$0xff] %vm925, %v1357
      %1390 = vst.msk [vmem:[%s192 + $0x18] sm:$0xff] %vm925, %v1358
      %1391 = vst.msk [vmem:[%s192 + $0x20] sm:$0xff] %vm925, %v1359
      %1392 = vst.msk [vmem:[%s192 + $0x28] sm:$0xff] %vm925, %v1360
      %1393 = vst.msk [vmem:[%s192 + $0x30] sm:$0xff] %vm925, %v1361
      %1394 = vst.msk [vmem:[%s192 + $0x38] sm:$0xff] %vm925, %v1362
      %1395 = vst.msk [vmem:[%s192 + $0x40] sm:$0xff] %vm925, %v1363
      %1396 = vst.msk [vmem:[%s192 + $0x48] sm:$0xff] %vm925, %v1364
      %1397 = vst.msk [vmem:[%s192 + $0x50] sm:$0xff] %vm925, %v1365
      %1398 = vst.msk [vmem:[%s192 + $0x58] sm:$0xff] %vm925, %v1366
      %1399 = vst.msk [vmem:[%s192 + $0x60] sm:$0xff] %vm925, %v1367
      %1400 = vst.msk [vmem:[%s192 + $0x68] sm:$0xff] %vm925, %v1368
      %1401 = vst.msk [vmem:[%s192 + $0x70] sm:$0xff] %vm925, %v1369
      %1402 = vst.msk [vmem:[%s192 + $0x78] sm:$0xff] %vm925, %v1370
      %1403 = vst.msk [vmem:[%s192 + $0x80] sm:$0xff] %vm925, %v1371
      %1404 = vst.msk [vmem:[%s192 + $0x88] sm:$0xff] %vm925, %v1372
      %1405 = vst.msk [vmem:[%s192 + $0x90] sm:$0xff] %vm925, %v1373
      %1406 = vst.msk [vmem:[%s192 + $0x98] sm:$0xff] %vm925, %v1374
      %1407 = vst.msk [vmem:[%s192 + $0xa0] sm:$0xff] %vm925, %v1375
      %1408 = vst.msk [vmem:[%s192 + $0xa8] sm:$0xff] %vm925, %v1376
      %1409 = vst.msk [vmem:[%s192 + $0xb0] sm:$0xff] %vm925, %v1377
      %1410 = vst.msk [vmem:[%s192 + $0xb8] sm:$0xff] %vm925, %v1378
      %1411 = vst.msk [vmem:[%s192 + $0xc0] sm:$0xff] %vm925, %v1379
      %1412 = vst.msk [vmem:[%s192 + $0xc8] sm:$0xff] %vm925, %v1380
      %1413 = vst.msk [vmem:[%s192 + $0xd0] sm:$0xff] %vm925, %v1381
      %1414 = vst.msk [vmem:[%s192 + $0xd8] sm:$0xff] %vm925, %v1382
      %1415 = vst.msk [vmem:[%s192 + $0xe0] sm:$0xff] %vm925, %v1383
      %1416 = vst.msk [vmem:[%s192 + $0xe8] sm:$0xff] %vm925, %v1384
      %1417 = vst.msk [vmem:[%s192 + $0xf0] sm:$0xff] %vm925, %v1385
      %1418 = vst.msk [vmem:[%s192 + $0xf8] sm:$0xff] %vm925, %v1386
      %s1419 = smul.u32 32, %s19
      %p1420 = scmp.lt.s32.totalorder %s18, 1
      %s1421 = scalar_select %p1420, %s18, 1
      %p1422 = scmp.lt.s32.totalorder %s1419, 31
      %s1423 = scalar_select %p1422, %s1419, 31
      %s1424 = smul.addr %s1421, 32
      %s1425 = sadd.s32 %s1423, %s1424
      %s1426 = smul.addr %s1425, 8
      %s1427 = scalar_lea.vmem %s3, %s1426
      // Predicated region
      $region33: #{tpu_custom_call.1} parent=31 // pred_check
        %p1428 = pneg %p114
      $region34: #{tpu_custom_call.1} parent=31 // pred_check_branch
        %1430 = sbr.rel (%p1428) target = $region36
      $region35: #{tpu_custom_call.1} parent=31 // pred_region
        %s1431 = smul.u32 32, %s19
      $region36: #{tpu_custom_call.1} parent=31 // pred_fallthru
        _
    $region32: #{tpu_custom_call.1} parent=5 // pred_fallthru
      _
    %p1432 = scmp.le.s32.totalorder 2, %s9
    // Predicated region
    $region37: #{tpu_custom_call.1} parent=5 // pred_check
      %p1433 = pneg %p1432
    $region38: #{tpu_custom_call.1} parent=5 // pred_check_branch
      %1435 = sbr.rel (%p1433) target = $region40
    $region39: #{tpu_custom_call.1} parent=5 // pred_region
      %s1436 = ssub.s32 %s9, 2
      // Predicated region
      $region41: #{tpu_custom_call.1} parent=39 // pred_check
        %p1437 = pneg %p120
      $region42: #{tpu_custom_call.1} parent=39 // pred_check_branch
        %1439 = sbr.rel (%p1437) target = $region44
      $region43: #{tpu_custom_call.1} parent=39 // pred_region
        %s1440 = smul.u32 32, %s21
        %p1441 = scmp.lt.s32.totalorder %s20, 1
        %s1442 = scalar_select %p1441, %s20, 1
        %p1443 = scmp.lt.s32.totalorder %s1440, 31
        %s1444 = scalar_select %p1443, %s1440, 31
        %s1445 = smul.addr %s1442, 32
        %s1446 = sadd.s32 %s1444, %s1445
        %s1447 = smul.addr %s1446, 8
        %s1448 = scalar_lea.vmem %s3, %s1447
      $region44: #{tpu_custom_call.1} parent=39 // pred_fallthru
        _
    $region40: #{tpu_custom_call.1} parent=5 // pred_fallthru
      _
  $region6: #{tpu_custom_call.1} parent=0 // loop_footer
    %s13 = sadd.s32 1, %s9
  $region7: #{tpu_custom_call.1} parent=0 // loop_footer_branch
    %8 = sbr.rel target = $region3
  $region8: #{tpu_custom_call.1} parent=0 // loop_exit
    _

</llo_original>
